<compile_context>
chip_gen: v6e
topology: v6e:2x2x1
jax: 0.10.0
libtpu: 0.0.40
codegen_flags: <defaults>
</compile_context>

<pallas_src>
import math

import jax
import jax.numpy as jnp
from jax.experimental import pallas as pl
from jax.experimental.pallas import tpu as pltpu

# ---------------- config (small synthetic shapes) ----------------
B = 2
H = W = 8
L = H * W             # 64 tokens  (L ** 0.5 == H == W)
C = 32                # hidden_dim = transformer.d_model
Q = 8                 # num_queries
NUM_CLASSES = 4
K1 = NUM_CLASSES + 1  # = 5
NUM_DEC_LAYERS = 2

# Packed head-parameter slab layout (lane dim padded to 128):
SLAB = 128
OFF_WC = 0            # class_embed:       cols [0, K1)
OFF_W1 = K1           # bbox MLP layer 0:  cols [K1, K1+C)
OFF_W2 = K1 + C       # bbox MLP layer 1:  cols [K1+C, K1+2C)
OFF_W3 = K1 + 2 * C   # bbox MLP layer 2:  cols [K1+2C, K1+2C+4)


# ------------- fused Pallas kernel: transformer stand-in + DETR heads -------------
def _detr_kernel(src_ref, pos_ref, qe_ref, w_ref, b_ref, out_ref):
    src = src_ref[...].astype(jnp.float32)              # (B, L, C)  values / memory
    pos = pos_ref[...].astype(jnp.float32)              # (1, L, C)  broadcast over B in-kernel
    qe = qe_ref[...].astype(jnp.float32)                # (Q, C)     query embeddings
    scale = 1.0 / math.sqrt(C)

    # keys carry the positional encoding; transpose ONCE (outside the decoder loop) so the
    # per-layer score contraction is a plain batched matmul with L in the lane dim.
    keys_t = jnp.transpose(src + pos, (0, 2, 1))         # (B, C, L)

    # TODO(synk): the real DETR Transformer (multi-head attn, LayerNorm, FFN, 6-layer
    # encoder/decoder) is an *injected* external module not defined in detr.py; this is a
    # simplified single-head cross-attention decoder stand-in with the correct interface.
    # The padding mask is all-False in DETR.forward, so masking is a no-op and is omitted.
    def attend(q):                                       # q: (B, Q, C)
        s = jnp.einsum("bqc,bcl->bql", q, keys_t,
                       preferred_element_type=jnp.float32) * scale        # (B, Q, L)
        s = s - jnp.max(s, axis=-1, keepdims=True)
        p = jnp.exp(s)
        # EUP approximate reciprocal: rows sum to 1 within ~1e-3 (deliberate inference tolerance).
        p = p * pl.reciprocal(jnp.sum(p, axis=-1, keepdims=True), approx=True)
        return jnp.einsum("bql,blc->bqc", p, src,
                          preferred_element_type=jnp.float32)             # (B, Q, C)

    qe_b = jnp.broadcast_to(qe[None, :, :], (B, Q, C))   # hoisted broadcast (not re-done per layer)
    tgt = attend(qe_b)                                   # peeled layer 0: tgt starts at zeros
    for _ in range(NUM_DEC_LAYERS - 1):
        tgt = tgt + attend(tgt + qe_b)

    # ---- DETR heads on the final decoder layer only (aux_loss=False) ----
    # Fold batch into rows: (B*Q, C) = (16, 32) to double MXU row fill.
    t2 = tgt.reshape(B * Q, C)
    wslab = w_ref[...]                                   # (C, 128) packed weights
    bslab = b_ref[...]                                   # (1, 128) packed biases

    # Fuse class head + bbox-MLP layer 0 (same input tgt) into one matmul, then split.
    fused = (jnp.dot(t2, wslab[:, OFF_WC:OFF_W1 + C],
                     preferred_element_type=jnp.float32)
             + bslab[:, OFF_WC:OFF_W1 + C])              # (B*Q, K1 + C)
    logits = fused[:, :K1]                               # class_embed output
    h = jnp.maximum(fused[:, K1:], 0.0)                  # relu(bbox layer 0)
    h = jnp.maximum(jnp.dot(h, wslab[:, OFF_W2:OFF_W2 + C],
                            preferred_element_type=jnp.float32)
                    + bslab[:, OFF_W2:OFF_W2 + C], 0.0)  # relu(bbox layer 1)
    box = (jnp.dot(h, wslab[:, OFF_W3:OFF_W3 + 4],
                   preferred_element_type=jnp.float32)
           + bslab[:, OFF_W3:OFF_W3 + 4])                # bbox layer 2 (pre-sigmoid)

    # Single lane-dense output slab: one unmasked (B, Q, 128) store.
    packed = jnp.concatenate(
        [logits, jax.nn.sigmoid(box),
         jnp.zeros((B * Q, SLAB - K1 - 4), jnp.float32)], axis=-1)        # (B*Q, 128)
    out_ref[...] = packed.reshape(B, Q, SLAB).astype(out_ref.dtype)


def run_detr(feature, pos_flat, query_embed, w_slab, b_slab):
    const2 = lambda i: (0, 0)
    const3 = lambda i: (0, 0, 0)
    return pl.pallas_call(
        _detr_kernel,
        out_shape=jax.ShapeDtypeStruct((B, Q, SLAB), jnp.float32),
        grid=(1,),                                       # single invocation: whole batch at once
        in_specs=[
            pl.BlockSpec((B, L, C), const3),             # feature   (full batch)
            pl.BlockSpec((1, L, C), const3),             # pos embedding
            pl.BlockSpec((Q, C), const2),                # query_embed.weight
            pl.BlockSpec((C, SLAB), const2),             # packed head weights
            pl.BlockSpec((1, SLAB), const2),             # packed head biases
        ],
        out_specs=pl.BlockSpec((B, Q, SLAB), const3),
        compiler_params=pltpu.CompilerParams(dimension_semantics=("arbitrary",)),
    )(feature, pos_flat, query_embed, w_slab, b_slab)


# ---------------- parameter init & packing (deterministic, in-script) ----------------
def init_params(key):
    ks = jax.random.split(key, 10)

    def lin(kw, kb, fan_in, fan_out):
        bound = 1.0 / math.sqrt(fan_in)                  # torch Linear default init
        w = jax.random.uniform(kw, (fan_in, fan_out), jnp.float32, -bound, bound)
        b = jax.random.uniform(kb, (fan_out,), jnp.float32, -bound, bound)
        return w, b

    wc, bc = lin(ks[0], ks[1], C, K1)                    # class_embed: Linear(hidden, num_classes+1)
    w1, b1 = lin(ks[2], ks[3], C, C)                     # bbox_embed MLP layer 0
    w2, b2 = lin(ks[4], ks[5], C, C)                     # bbox_embed MLP layer 1
    w3, b3 = lin(ks[6], ks[7], C, 4)                     # bbox_embed MLP layer 2

    # Pack all head params into two lane-dense slabs (done once, host-side).
    w_slab = jnp.zeros((C, SLAB), jnp.float32)
    w_slab = w_slab.at[:, OFF_WC:OFF_WC + K1].set(wc)
    w_slab = w_slab.at[:, OFF_W1:OFF_W1 + C].set(w1)
    w_slab = w_slab.at[:, OFF_W2:OFF_W2 + C].set(w2)
    w_slab = w_slab.at[:, OFF_W3:OFF_W3 + 4].set(w3)
    b_slab = jnp.zeros((1, SLAB), jnp.float32)
    b_slab = b_slab.at[0, OFF_WC:OFF_WC + K1].set(bc)
    b_slab = b_slab.at[0, OFF_W1:OFF_W1 + C].set(b1)
    b_slab = b_slab.at[0, OFF_W2:OFF_W2 + C].set(b2)
    b_slab = b_slab.at[0, OFF_W3:OFF_W3 + 4].set(b3)

    query_embed = jax.random.normal(ks[8], (Q, C), jnp.float32)           # nn.Embedding ~ N(0,1)
    # pos_embed: zeros then trunc_normal_(std=0.02), shape [1, C, sqrt(L), sqrt(L)]
    pos_embed = 0.02 * jax.random.truncated_normal(ks[9], -2.0, 2.0, (1, C, H, W), jnp.float32)
    return dict(w_slab=w_slab, b_slab=b_slab, query_embed=query_embed, pos_embed=pos_embed)


# ---------------- DETR forward ----------------
def detr_forward(feature, params):
    Bf, Lf, Cf = feature.shape
    # pos_embed [1, C, H, W] -> [1, L, C]; tiny one-time flatten. Broadcast over B happens
    # inside the kernel (no [B, L, C] HBM copy). mask = zeros (all valid) -> masking is a no-op.
    pos_flat = jnp.transpose(params["pos_embed"].reshape(1, Cf, Lf), (0, 2, 1))
    packed = run_detr(feature, pos_flat, params["query_embed"],
                      params["w_slab"], params["b_slab"])
    # Slice the lane-dense output slab in plain JAX (aux_loss=False: final layer only).
    return {"pred_logits": packed[:, :, :K1],
            "pred_boxes": packed[:, :, K1:K1 + 4]}


if __name__ == "__main__":
    key = jax.random.PRNGKey(0)
    kf, kp = jax.random.split(key)
    feature = jax.random.normal(kf, (B, L, C), jnp.float32)               # [B, L, C]
    params = init_params(kp)
    out = detr_forward(feature, params)
    jax.block_until_ready(out)
    assert out["pred_logits"].shape == (B, Q, K1)
    assert out["pred_boxes"].shape == (B, Q, 4)
    assert bool(jnp.all(jnp.isfinite(out["pred_logits"])))
    assert bool(jnp.all((out["pred_boxes"] >= 0) & (out["pred_boxes"] <= 1)))
    print("KERNEL_OK")
</pallas_src>

<mosaic_0001>
module attributes {stable_mosaic.version = 11 : i64} {
  func.func @_detr_kernel(%arg0: i32, %arg1: memref<2x64x32xf32, #tpu.memory_space<vmem>>, %arg2: memref<1x64x32xf32, #tpu.memory_space<vmem>>, %arg3: memref<8x32xf32, #tpu.memory_space<vmem>>, %arg4: memref<32x128xf32, #tpu.memory_space<vmem>>, %arg5: memref<1x128xf32, #tpu.memory_space<vmem>>, %arg6: memref<2x8x128xf32, #tpu.memory_space<vmem>>) attributes {dimension_semantics = [#tpu.dimension_semantics<arbitrary>], iteration_bounds = array<i64: 1>, scalar_prefetch = 0 : i64, scratch_operands = 0 : i64, tpu.core_type = #tpu.core_type<tc>, window_params = [{pipeline_mode = #tpu.pipeline_mode<synchronous>, transform_indices = @transform_0, window_bounds = array<i64: 2, 64, 32>}, {pipeline_mode = #tpu.pipeline_mode<synchronous>, transform_indices = @transform_1, window_bounds = array<i64: 1, 64, 32>}, {pipeline_mode = #tpu.pipeline_mode<synchronous>, transform_indices = @transform_2, window_bounds = array<i64: 8, 32>}, {pipeline_mode = #tpu.pipeline_mode<synchronous>, transform_indices = @transform_3, window_bounds = array<i64: 32, 128>}, {pipeline_mode = #tpu.pipeline_mode<synchronous>, transform_indices = @transform_4, window_bounds = array<i64: 1, 128>}, {pipeline_mode = #tpu.pipeline_mode<synchronous>, transform_indices = @transform_5, window_bounds = array<i64: 2, 8, 128>}]} {
    %c0 = arith.constant 0 : index
    %c0_0 = arith.constant 0 : index
    %c0_1 = arith.constant 0 : index
    %0 = vector.load %arg1[%c0, %c0_0, %c0_1] : memref<2x64x32xf32, #tpu.memory_space<vmem>>, vector<2x64x32xf32>
    %c0_2 = arith.constant 0 : index
    %c0_3 = arith.constant 0 : index
    %c0_4 = arith.constant 0 : index
    %1 = vector.load %arg2[%c0_2, %c0_3, %c0_4] : memref<1x64x32xf32, #tpu.memory_space<vmem>>, vector<1x64x32xf32>
    %c0_5 = arith.constant 0 : index
    %c0_6 = arith.constant 0 : index
    %2 = vector.load %arg3[%c0_5, %c0_6] : memref<8x32xf32, #tpu.memory_space<vmem>>, vector<8x32xf32>
    %3 = vector.broadcast %1 : vector<1x64x32xf32> to vector<2x64x32xf32>
    %4 = arith.addf %0, %3 : vector<2x64x32xf32>
    %5 = tpu.transpose %4, [0, 2, 1] : vector<2x64x32xf32> -> vector<2x32x64xf32>
    %6 = vector.shape_cast %2 : vector<8x32xf32> to vector<1x8x32xf32>
    %7 = vector.shape_cast %6 : vector<1x8x32xf32> to vector<1x8x32xf32>
    %8 = vector.broadcast %7 : vector<1x8x32xf32> to vector<2x8x32xf32>
    "tpu.trace_start"() <{level = 10 : i32, message = "bqc,bcl->bql"}> : () -> ()
    %cst = arith.constant dense<0.000000e+00> : vector<2x8x64xf32>
    %9 = tpu.matmul %8, %5, %cst {dimension_numbers = #tpu.dot_dimension_numbers<[2], [1], [1], [2], [0, 0, 0, 1, 1, 2], [0], [0]>} : vector<2x8x32xf32>, vector<2x32x64xf32>, vector<2x8x64xf32> -> vector<2x8x64xf32>
    "tpu.trace_stop"() : () -> ()
    %cst_7 = arith.constant 0.176776692 : f32
    %10 = vector.broadcast %cst_7 : f32 to vector<2x8x64xf32>
    %11 = arith.mulf %9, %10 : vector<2x8x64xf32>
    %cst_8 = arith.constant dense<0xFF800000> : vector<2x8xf32>
    %12 = vector.multi_reduction <maximumf>, %11, %cst_8 [2] : vector<2x8x64xf32> to vector<2x8xf32>
    %13 = vector.shape_cast %12 : vector<2x8xf32> to vector<2x8x1xf32>
    %14 = vector.broadcast %13 : vector<2x8x1xf32> to vector<2x8x64xf32>
    %15 = arith.subf %11, %14 : vector<2x8x64xf32>
    %16 = math.exp %15 : vector<2x8x64xf32>
    %cst_9 = arith.constant dense<0.000000e+00> : vector<2x8xf32>
    %17 = vector.multi_reduction <add>, %16, %cst_9 [2] : vector<2x8x64xf32> to vector<2x8xf32>
    %18 = vector.shape_cast %17 : vector<2x8xf32> to vector<2x8x1xf32>
    %19 = tpu.reciprocal %18 {approx = true} : vector<2x8x1xf32> -> vector<2x8x1xf32>
    %20 = vector.broadcast %19 : vector<2x8x1xf32> to vector<2x8x64xf32>
    %21 = arith.mulf %16, %20 : vector<2x8x64xf32>
    "tpu.trace_start"() <{level = 10 : i32, message = "bql,blc->bqc"}> : () -> ()
    %cst_10 = arith.constant dense<0.000000e+00> : vector<2x8x32xf32>
    %22 = tpu.matmul %21, %0, %cst_10 {dimension_numbers = #tpu.dot_dimension_numbers<[2], [1], [1], [2], [0, 0, 0, 1, 1, 2], [0], [0]>} : vector<2x8x64xf32>, vector<2x64x32xf32>, vector<2x8x32xf32> -> vector<2x8x32xf32>
    "tpu.trace_stop"() : () -> ()
    %23 = arith.addf %22, %8 : vector<2x8x32xf32>
    "tpu.trace_start"() <{level = 10 : i32, message = "bqc,bcl->bql"}> : () -> ()
    %cst_11 = arith.constant dense<0.000000e+00> : vector<2x8x64xf32>
    %24 = tpu.matmul %23, %5, %cst_11 {dimension_numbers = #tpu.dot_dimension_numbers<[2], [1], [1], [2], [0, 0, 0, 1, 1, 2], [0], [0]>} : vector<2x8x32xf32>, vector<2x32x64xf32>, vector<2x8x64xf32> -> vector<2x8x64xf32>
    "tpu.trace_stop"() : () -> ()
    %cst_12 = arith.constant 0.176776692 : f32
    %25 = vector.broadcast %cst_12 : f32 to vector<2x8x64xf32>
    %26 = arith.mulf %24, %25 : vector<2x8x64xf32>
    %cst_13 = arith.constant dense<0xFF800000> : vector<2x8xf32>
    %27 = vector.multi_reduction <maximumf>, %26, %cst_13 [2] : vector<2x8x64xf32> to vector<2x8xf32>
    %28 = vector.shape_cast %27 : vector<2x8xf32> to vector<2x8x1xf32>
    %29 = vector.broadcast %28 : vector<2x8x1xf32> to vector<2x8x64xf32>
    %30 = arith.subf %26, %29 : vector<2x8x64xf32>
    %31 = math.exp %30 : vector<2x8x64xf32>
    %cst_14 = arith.constant dense<0.000000e+00> : vector<2x8xf32>
    %32 = vector.multi_reduction <add>, %31, %cst_14 [2] : vector<2x8x64xf32> to vector<2x8xf32>
    %33 = vector.shape_cast %32 : vector<2x8xf32> to vector<2x8x1xf32>
    %34 = tpu.reciprocal %33 {approx = true} : vector<2x8x1xf32> -> vector<2x8x1xf32>
    %35 = vector.broadcast %34 : vector<2x8x1xf32> to vector<2x8x64xf32>
    %36 = arith.mulf %31, %35 : vector<2x8x64xf32>
    "tpu.trace_start"() <{level = 10 : i32, message = "bql,blc->bqc"}> : () -> ()
    %cst_15 = arith.constant dense<0.000000e+00> : vector<2x8x32xf32>
    %37 = tpu.matmul %36, %0, %cst_15 {dimension_numbers = #tpu.dot_dimension_numbers<[2], [1], [1], [2], [0, 0, 0, 1, 1, 2], [0], [0]>} : vector<2x8x64xf32>, vector<2x64x32xf32>, vector<2x8x32xf32> -> vector<2x8x32xf32>
    "tpu.trace_stop"() : () -> ()
    %38 = arith.addf %22, %37 : vector<2x8x32xf32>
    %39 = vector.shape_cast %38 : vector<2x8x32xf32> to vector<16x32xf32>
    %c0_16 = arith.constant 0 : index
    %c0_17 = arith.constant 0 : index
    %40 = vector.load %arg4[%c0_16, %c0_17] : memref<32x128xf32, #tpu.memory_space<vmem>>, vector<32x128xf32>
    %c0_18 = arith.constant 0 : index
    %c0_19 = arith.constant 0 : index
    %41 = vector.load %arg5[%c0_18, %c0_19] : memref<1x128xf32, #tpu.memory_space<vmem>>, vector<1x128xf32>
    %42 = vector.extract_strided_slice %40 {offsets = [0, 0], sizes = [32, 37], strides = [1, 1]} : vector<32x128xf32> to vector<32x37xf32>
    %cst_20 = arith.constant dense<0.000000e+00> : vector<16x37xf32>
    %43 = tpu.matmul %39, %42, %cst_20 {dimension_numbers = #tpu.dot_dimension_numbers<[1], [0], [0], [1], [0, 0, 1, 1], [], []>} : vector<16x32xf32>, vector<32x37xf32>, vector<16x37xf32> -> vector<16x37xf32>
    %44 = vector.extract_strided_slice %41 {offsets = [0, 0], sizes = [1, 37], strides = [1, 1]} : vector<1x128xf32> to vector<1x37xf32>
    %45 = vector.broadcast %44 : vector<1x37xf32> to vector<16x37xf32>
    %46 = arith.addf %43, %45 : vector<16x37xf32>
    %47 = vector.extract_strided_slice %46 {offsets = [0, 0], sizes = [16, 5], strides = [1, 1]} : vector<16x37xf32> to vector<16x5xf32>
    %48 = vector.extract_strided_slice %46 {offsets = [0, 5], sizes = [16, 32], strides = [1, 1]} : vector<16x37xf32> to vector<16x32xf32>
    %cst_21 = arith.constant 0.000000e+00 : f32
    %49 = vector.broadcast %cst_21 : f32 to vector<16x32xf32>
    %50 = arith.maximumf %48, %49 : vector<16x32xf32>
    %51 = vector.extract_strided_slice %40 {offsets = [0, 37], sizes = [32, 32], strides = [1, 1]} : vector<32x128xf32> to vector<32x32xf32>
    %cst_22 = arith.constant dense<0.000000e+00> : vector<16x32xf32>
    %52 = tpu.matmul %50, %51, %cst_22 {dimension_numbers = #tpu.dot_dimension_numbers<[1], [0], [0], [1], [0, 0, 1, 1], [], []>} : vector<16x32xf32>, vector<32x32xf32>, vector<16x32xf32> -> vector<16x32xf32>
    %53 = vector.extract_strided_slice %41 {offsets = [0, 37], sizes = [1, 32], strides = [1, 1]} : vector<1x128xf32> to vector<1x32xf32>
    %54 = vector.broadcast %53 : vector<1x32xf32> to vector<16x32xf32>
    %55 = arith.addf %52, %54 : vector<16x32xf32>
    %cst_23 = arith.constant 0.000000e+00 : f32
    %56 = vector.broadcast %cst_23 : f32 to vector<16x32xf32>
    %57 = arith.maximumf %55, %56 : vector<16x32xf32>
    %58 = vector.extract_strided_slice %40 {offsets = [0, 69], sizes = [32, 4], strides = [1, 1]} : vector<32x128xf32> to vector<32x4xf32>
    %cst_24 = arith.constant dense<0.000000e+00> : vector<16x4xf32>
    %59 = tpu.matmul %57, %58, %cst_24 {dimension_numbers = #tpu.dot_dimension_numbers<[1], [0], [0], [1], [0, 0, 1, 1], [], []>} : vector<16x32xf32>, vector<32x4xf32>, vector<16x4xf32> -> vector<16x4xf32>
    %60 = vector.extract_strided_slice %41 {offsets = [0, 69], sizes = [1, 4], strides = [1, 1]} : vector<1x128xf32> to vector<1x4xf32>
    %61 = vector.broadcast %60 : vector<1x4xf32> to vector<16x4xf32>
    %62 = arith.addf %59, %61 : vector<16x4xf32>
    %63 = arith.negf %62 : vector<16x4xf32>
    %64 = math.exp %63 : vector<16x4xf32>
    %cst_25 = arith.constant 1.000000e+00 : f32
    %65 = vector.broadcast %cst_25 : f32 to vector<16x4xf32>
    %66 = arith.addf %65, %64 : vector<16x4xf32>
    %67 = arith.divf %65, %66 : vector<16x4xf32>
    %cst_26 = arith.constant 0.000000e+00 : f32
    %68 = vector.broadcast %cst_26 : f32 to vector<16x119xf32>
    %69 = tpu.concatenate %47, %67, %68 in 1 : vector<16x5xf32>, vector<16x4xf32>, vector<16x119xf32> -> vector<16x128xf32>
    %70 = vector.shape_cast %69 : vector<16x128xf32> to vector<2x8x128xf32>
    %c0_27 = arith.constant 0 : index
    %c0_28 = arith.constant 0 : index
    %c0_29 = arith.constant 0 : index
    %71 = vector.load %arg6[%c0_27, %c0_28, %c0_29] : memref<2x8x128xf32, #tpu.memory_space<vmem>>, vector<2x8x128xf32>
    tpu.vector_store %arg6[%c0_27, %c0_28, %c0_29], %70 {strides = array<i32>} : memref<2x8x128xf32, #tpu.memory_space<vmem>>, vector<2x8x128xf32>,
    return
  }
  func.func @transform_0(%arg0: i32) -> (i32, i32, i32) {
    %c0_i32 = arith.constant 0 : i32
    %c0_i32_0 = arith.constant 0 : i32
    %c0_i32_1 = arith.constant 0 : i32
    %c0_i32_2 = arith.constant 0 : i32
    return %c0_i32, %c0_i32_0, %c0_i32_1 : i32, i32, i32
  }
  func.func @transform_1(%arg0: i32) -> (i32, i32, i32) {
    %c0_i32 = arith.constant 0 : i32
    %c0_i32_0 = arith.constant 0 : i32
    %c0_i32_1 = arith.constant 0 : i32
    %c0_i32_2 = arith.constant 0 : i32
    return %c0_i32, %c0_i32_0, %c0_i32_1 : i32, i32, i32
  }
  func.func @transform_2(%arg0: i32) -> (i32, i32) {
    %c0_i32 = arith.constant 0 : i32
    %c0_i32_0 = arith.constant 0 : i32
    %c0_i32_1 = arith.constant 0 : i32
    return %c0_i32, %c0_i32_0 : i32, i32
  }
  func.func @transform_3(%arg0: i32) -> (i32, i32) {
    %c0_i32 = arith.constant 0 : i32
    %c0_i32_0 = arith.constant 0 : i32
    %c0_i32_1 = arith.constant 0 : i32
    return %c0_i32, %c0_i32_0 : i32, i32
  }
  func.func @transform_4(%arg0: i32) -> (i32, i32) {
    %c0_i32 = arith.constant 0 : i32
    %c0_i32_0 = arith.constant 0 : i32
    %c0_i32_1 = arith.constant 0 : i32
    return %c0_i32, %c0_i32_0 : i32, i32
  }
  func.func @transform_5(%arg0: i32) -> (i32, i32, i32) {
    %c0_i32 = arith.constant 0 : i32
    %c0_i32_0 = arith.constant 0 : i32
    %c0_i32_1 = arith.constant 0 : i32
    %c0_i32_2 = arith.constant 0 : i32
    return %c0_i32, %c0_i32_0, %c0_i32_1 : i32, i32, i32
  }
}

</mosaic_0001>

<llo_original>
// kernel: tpu_custom_call.1
$region0: #{tpu_custom_call.1}
  #allocation0 [shape = 'u32[]', space=smem, size = 0x4, offset = 0x4, fixed_abs, tag = 'smem constant byte address 0x4 - core index']
  #allocation1 [shape = 'u32[144,128]{1,0:T(1,128)}', space=vmem, size = 0x12000, scoped, tag = 'internal scratch']
  %s0 = inlined_call_operand.vmem [shape: f32[2,64,32], index: 0, kind: input, shape index: {}]
  %s1 = inlined_call_operand.vmem [shape: f32[1,64,32], index: 1, kind: input, shape index: {}]
  %s2 = inlined_call_operand.vmem [shape: f32[8,32], index: 2, kind: input, shape index: {}]
  %s3 = inlined_call_operand.vmem [shape: f32[32,128], index: 3, kind: input, shape index: {}]
  %s4 = inlined_call_operand.vmem [shape: f32[1,128], index: 4, kind: input, shape index: {}]
  %s5 = inlined_call_operand.hbm [shape: f32[2,8,128], index: 5, kind: output, shape index: {}]
  %s6 = sld [smem:[#allocation0]]
  $region30: #{tpu_custom_call.1} parent=0
    _
  %s8 = ssub.s32 1, %s6
  %s9 = scalar_select 0, %s8, %s6
  $region1: #{tpu_custom_call.1} parent=0
    #allocation2 [shape = 'u8[8192]{0}', space=vmem, size = 0x2000, scoped, tag = 'output window, operand 0, single buffered']
    #allocation3 [shape = 's32[1]{0}', space=sflag, size = 0x4, scoped, tag = 'scoped memory for tpu_custom_call.1']
    %10 = vsyncpa [#allocation3], 0
    // Predicated region
    $region2: #{tpu_custom_call.1} parent=1 // pred_check
      _
    $region3: #{tpu_custom_call.1} parent=1 // pred_check_branch
      %12 = sbr.rel (0) target = $region5
    $region4: #{tpu_custom_call.1} parent=1 // pred_region
      _
    $region5: #{tpu_custom_call.1} parent=1 // pred_fallthru
      _
    // Predicated region
    $region6: #{tpu_custom_call.1} parent=1 // pred_check
      _
    $region7: #{tpu_custom_call.1} parent=1 // pred_check_branch
      %14 = sbr.rel (0) target = $region9
    $region8: #{tpu_custom_call.1} parent=1 // pred_region
      _
    $region9: #{tpu_custom_call.1} parent=1 // pred_fallthru
      _
    // Predicated region
    $region10: #{tpu_custom_call.1} parent=1 // pred_check
      _
    $region11: #{tpu_custom_call.1} parent=1 // pred_check_branch
      %16 = sbr.rel (0) target = $region13
    $region12: #{tpu_custom_call.1} parent=1 // pred_region
      _
    $region13: #{tpu_custom_call.1} parent=1 // pred_fallthru
      _
    // Predicated region
    $region14: #{tpu_custom_call.1} parent=1 // pred_check
      _
    $region15: #{tpu_custom_call.1} parent=1 // pred_check_branch
      %18 = sbr.rel (0) target = $region17
    $region16: #{tpu_custom_call.1} parent=1 // pred_region
      _
    $region17: #{tpu_custom_call.1} parent=1 // pred_fallthru
      _
    // Predicated region
    $region18: #{tpu_custom_call.1} parent=1 // pred_check
      _
    $region19: #{tpu_custom_call.1} parent=1 // pred_check_branch
      %20 = sbr.rel (0) target = $region21
    $region20: #{tpu_custom_call.1} parent=1 // pred_region
      _
    $region21: #{tpu_custom_call.1} parent=1 // pred_fallthru
      _
    %v21 = vld [vmem:[%s0] sm:$0xff]
    %v22 = vld [vmem:[%s0 + $0x8] sm:$0xff]
    %v23 = vld [vmem:[%s0 + $0x10] sm:$0xff]
    %v24 = vld [vmem:[%s0 + $0x18] sm:$0xff]
    %v25 = vld [vmem:[%s0 + $0x20] sm:$0xff]
    %v26 = vld [vmem:[%s0 + $0x28] sm:$0xff]
    %v27 = vld [vmem:[%s0 + $0x30] sm:$0xff]
    %v28 = vld [vmem:[%s0 + $0x38] sm:$0xff]
    %v29 = vld [vmem:[%s0 + $0x40] sm:$0xff]
    %v30 = vld [vmem:[%s0 + $0x48] sm:$0xff]
    %v31 = vld [vmem:[%s0 + $0x50] sm:$0xff]
    %v32 = vld [vmem:[%s0 + $0x58] sm:$0xff]
    %v33 = vld [vmem:[%s0 + $0x60] sm:$0xff]
    %v34 = vld [vmem:[%s0 + $0x68] sm:$0xff]
    %v35 = vld [vmem:[%s0 + $0x70] sm:$0xff]
    %v36 = vld [vmem:[%s0 + $0x78] sm:$0xff]
    %v37 = vld [vmem:[%s1] sm:$0xff]
    %v38 = vld [vmem:[%s1 + $0x8] sm:$0xff]
    %v39 = vld [vmem:[%s1 + $0x10] sm:$0xff]
    %v40 = vld [vmem:[%s1 + $0x18] sm:$0xff]
    %v41 = vld [vmem:[%s1 + $0x20] sm:$0xff]
    %v42 = vld [vmem:[%s1 + $0x28] sm:$0xff]
    %v43 = vld [vmem:[%s1 + $0x30] sm:$0xff]
    %v44 = vld [vmem:[%s1 + $0x38] sm:$0xff]
    %v45 = vld [vmem:[%s2] sm:$0xff]
    %v46 = vadd.f32 %v21, %v37
    %v47 = vadd.f32 %v22, %v38
    %v48 = vadd.f32 %v23, %v39
    %v49 = vadd.f32 %v24, %v40
    %v50 = vadd.f32 %v25, %v41
    %v51 = vadd.f32 %v26, %v42
    %v52 = vadd.f32 %v27, %v43
    %v53 = vadd.f32 %v28, %v44
    %v54 = vadd.f32 %v29, %v37
    %v55 = vadd.f32 %v30, %v38
    %v56 = vadd.f32 %v31, %v39
    %v57 = vadd.f32 %v32, %v40
    %v58 = vadd.f32 %v33, %v41
    %v59 = vadd.f32 %v34, %v42
    %v60 = vadd.f32 %v35, %v43
    %v61 = vadd.f32 %v36, %v44
    %vm62 = vcmask 261120
    %v64 = vsel %vm62, %v45, 0
    %v67 = vsel %vm62, %v46, 0
    %v70 = vsel %vm62, %v47, 0
    %v73 = vsel %vm62, %v48, 0
    %v76 = vsel %vm62, %v49, 0
    %v79 = vsel %vm62, %v50, 0
    %v82 = vsel %vm62, %v51, 0
    %v85 = vsel %vm62, %v52, 0
    %v88 = vsel %vm62, %v53, 0
    %90 = vmatprep.subr.mxu0 0.0
    %91 = vmatpush1.xpose.msra.mxu0 0.0
    %92 = vmatprep.subr.mxu0 0.0
    %93 = vmatpush1.xpose.msra.mxu0 0.0
    %94 = vmatprep.subr.mxu0 0.0
    %95 = vmatpush1.xpose.msra.mxu0 0.0
    %96 = vmatprep.subr.mxu0 0.0
    %97 = vmatpush1.xpose.msra.mxu0 0.0
    %98 = vmatprep.subr.mxu0 0.0
    %99 = vmatpush1.xpose.msra.mxu0 0.0
    %100 = vmatprep.subr.mxu0 0.0
    %101 = vmatpush1.xpose.msra.mxu0 0.0
    %102 = vmatprep.subr.mxu0 0.0
    %103 = vmatpush1.xpose.msra.mxu0 0.0
    %104 = vmatprep.subr.mxu0 0.0
    %105 = vmatpush1.xpose.msra.mxu0 0.0
    %106 = vmatprep.subr.mxu0 0.0
    %107 = vmatpush1.xpose.msra.mxu0 %v88
    %108 = vmatprep.subr.mxu0 0.0
    %109 = vmatpush1.xpose.msra.mxu0 %v85
    %110 = vmatprep.subr.mxu0 0.0
    %111 = vmatpush1.xpose.msra.mxu0 %v82
    %112 = vmatprep.subr.mxu0 0.0
    %113 = vmatpush1.xpose.msra.mxu0 %v79
    %114 = vmatprep.subr.mxu0 0.0
    %115 = vmatpush1.xpose.msra.mxu0 %v76
    %116 = vmatprep.subr.mxu0 0.0
    %117 = vmatpush1.xpose.msra.mxu0 %v73
    %118 = vmatprep.subr.mxu0 0.0
    %119 = vmatpush1.xpose.msra.mxu0 %v70
    %120 = vmatprep.subr.mxu0 0.0
    %121 = vmatpush1.xpose.msra.mxu0 %v67
    %122 = vmatprep.subr.mxu0 0.0
    %123 = vmatpush2.xpose.msra.mxu0 0.0
    %124 = vmatprep.subr.mxu0 0.0
    %125 = vmatpush2.xpose.msra.mxu0 0.0
    %126 = vmatprep.subr.mxu0 0.0
    %127 = vmatpush2.xpose.msra.mxu0 0.0
    %128 = vmatprep.subr.mxu0 0.0
    %129 = vmatpush2.xpose.msra.mxu0 0.0
    %130 = vmatprep.subr.mxu0 0.0
    %131 = vmatpush2.xpose.msra.mxu0 0.0
    %132 = vmatprep.subr.mxu0 0.0
    %133 = vmatpush2.xpose.msra.mxu0 0.0
    %134 = vmatprep.subr.mxu0 0.0
    %135 = vmatpush2.xpose.msra.mxu0 0.0
    %136 = vmatprep.subr.mxu0 0.0
    %137 = vmatpush2.xpose.msra.mxu0 0.0
    %138 = vmatprep.subr.mxu0 0.0
    %139 = vmatpush2.xpose.msra.mxu0 0.0
    %140 = vmatprep.subr.mxu0 0.0
    %141 = vmatpush2.xpose.msra.mxu0 0.0
    %142 = vmatprep.subr.mxu0 0.0
    %143 = vmatpush2.xpose.msra.mxu0 0.0
    %144 = vmatprep.subr.mxu0 0.0
    %145 = vmatpush2.xpose.msra.mxu0 0.0
    %146 = vmatprep.subr.mxu0 0.0
    %147 = vmatpush2.xpose.msra.mxu0 0.0
    %148 = vmatprep.subr.mxu0 0.0
    %149 = vmatpush2.xpose.msra.mxu0 0.0
    %150 = vmatprep.subr.mxu0 0.0
    %151 = vmatpush2.xpose.msra.mxu0 0.0
    %152 = vmatprep.subr.mxu0 0.0
    %153 = vmatpush2.xpose.msra.mxu0 0.0
    %154 = vmatprep.mubr.f32.mxu0 0.0
    %155 = vmatmul.mubr.f32.gmra.mxu0 %v64
    %v156 = vpop.f32.mrf.mxu0
    %v157 = vadd.f32 0.0, %v156
    %v158 = vpop.f32.mrf.mxu0
    %159 = vdwg.mxu0
    %v161 = vsel %vm62, %v54, 0
    %v164 = vsel %vm62, %v55, 0
    %v167 = vsel %vm62, %v56, 0
    %v170 = vsel %vm62, %v57, 0
    %v173 = vsel %vm62, %v58, 0
    %v176 = vsel %vm62, %v59, 0
    %v179 = vsel %vm62, %v60, 0
    %v182 = vsel %vm62, %v61, 0
    %184 = vmatprep.subr.mxu0 0.0
    %185 = vmatpush1.xpose.msra.mxu0 0.0
    %186 = vmatprep.subr.mxu0 0.0
    %187 = vmatpush1.xpose.msra.mxu0 0.0
    %188 = vmatprep.subr.mxu0 0.0
    %189 = vmatpush1.xpose.msra.mxu0 0.0
    %190 = vmatprep.subr.mxu0 0.0
    %191 = vmatpush1.xpose.msra.mxu0 0.0
    %192 = vmatprep.subr.mxu0 0.0
    %193 = vmatpush1.xpose.msra.mxu0 0.0
    %194 = vmatprep.subr.mxu0 0.0
    %195 = vmatpush1.xpose.msra.mxu0 0.0
    %196 = vmatprep.subr.mxu0 0.0
    %197 = vmatpush1.xpose.msra.mxu0 0.0
    %198 = vmatprep.subr.mxu0 0.0
    %199 = vmatpush1.xpose.msra.mxu0 0.0
    %200 = vmatprep.subr.mxu0 0.0
    %201 = vmatpush1.xpose.msra.mxu0 %v182
    %202 = vmatprep.subr.mxu0 0.0
    %203 = vmatpush1.xpose.msra.mxu0 %v179
    %204 = vmatprep.subr.mxu0 0.0
    %205 = vmatpush1.xpose.msra.mxu0 %v176
    %206 = vmatprep.subr.mxu0 0.0
    %207 = vmatpush1.xpose.msra.mxu0 %v173
    %208 = vmatprep.subr.mxu0 0.0
    %209 = vmatpush1.xpose.msra.mxu0 %v170
    %210 = vmatprep.subr.mxu0 0.0
    %211 = vmatpush1.xpose.msra.mxu0 %v167
    %212 = vmatprep.subr.mxu0 0.0
    %213 = vmatpush1.xpose.msra.mxu0 %v164
    %214 = vmatprep.subr.mxu0 0.0
    %215 = vmatpush1.xpose.msra.mxu0 %v161
    %216 = vmatprep.subr.mxu0 0.0
    %217 = vmatpush2.xpose.msra.mxu0 0.0
    %218 = vmatprep.subr.mxu0 0.0
    %219 = vmatpush2.xpose.msra.mxu0 0.0
    %220 = vmatprep.subr.mxu0 0.0
    %221 = vmatpush2.xpose.msra.mxu0 0.0
    %222 = vmatprep.subr.mxu0 0.0
    %223 = vmatpush2.xpose.msra.mxu0 0.0
    %224 = vmatprep.subr.mxu0 0.0
    %225 = vmatpush2.xpose.msra.mxu0 0.0
    %226 = vmatprep.subr.mxu0 0.0
    %227 = vmatpush2.xpose.msra.mxu0 0.0
    %228 = vmatprep.subr.mxu0 0.0
    %229 = vmatpush2.xpose.msra.mxu0 0.0
    %230 = vmatprep.subr.mxu0 0.0
    %231 = vmatpush2.xpose.msra.mxu0 0.0
    %232 = vmatprep.subr.mxu0 0.0
    %233 = vmatpush2.xpose.msra.mxu0 0.0
    %234 = vmatprep.subr.mxu0 0.0
    %235 = vmatpush2.xpose.msra.mxu0 0.0
    %236 = vmatprep.subr.mxu0 0.0
    %237 = vmatpush2.xpose.msra.mxu0 0.0
    %238 = vmatprep.subr.mxu0 0.0
    %239 = vmatpush2.xpose.msra.mxu0 0.0
    %240 = vmatprep.subr.mxu0 0.0
    %241 = vmatpush2.xpose.msra.mxu0 0.0
    %242 = vmatprep.subr.mxu0 0.0
    %243 = vmatpush2.xpose.msra.mxu0 0.0
    %244 = vmatprep.subr.mxu0 0.0
    %245 = vmatpush2.xpose.msra.mxu0 0.0
    %246 = vmatprep.subr.mxu0 0.0
    %247 = vmatpush2.xpose.msra.mxu0 0.0
    %248 = vmatprep.mubr.f32.mxu0 0.0
    %249 = vmatmul.mubr.f32.gmra.mxu0 %v64
    %v250 = vpop.f32.mrf.mxu0
    %v251 = vadd.f32 0.0, %v250
    %v252 = vpop.f32.mrf.mxu0
    %253 = vdwg.mxu0
    %v254 = vmul.f32 %v157, 0.17677669
    %v255 = vmul.f32 %v251, 0.17677669
    %vm256 = vcmask 523264
    %v257 = vsel %vm256, %v254, -inf
    %258 = vmax.xlane.f32.xlu0 %v257
    %v259 = vpop.xlane.xlu0 %258
    %v260 = vsel %vm256, %v255, -inf
    %261 = vmax.xlane.f32.xlu0 %v260
    %v262 = vpop.xlane.xlu0 %261
    %v263 = vsub.f32 %v254, %v259
    %v264 = vsub.f32 %v255, %v262
    %v265 = vmul.f32 %v263, 1.442695
    %v266 = vpow.pop %v265
    %v267 = vmul.f32 %v264, 1.442695
    %v268 = vpow.pop %v267
    %v269 = vsel %vm256, %v266, 0.0
    %270 = vadd.xlane.f32.xlu0 %v269
    %v271 = vpop.xlane.xlu0 %270
    %v272 = vsel %vm256, %v268, 0.0
    %273 = vadd.xlane.f32.xlu0 %v272
    %v274 = vpop.xlane.xlu0 %273
    %v275 = vrcp.pop %v271
    %v276 = vrcp.pop %v274
    %v277 = vmul.f32 %v266, %v275
    %v278 = vmul.f32 %v268, %v276
    %v280 = vsel %vm256, %v277, 0
    %282 = vmatprep.subr.mxu0 0.0
    %283 = vmatpush1.msra.mxu0 0.0
    %284 = vmatprep.subr.mxu0 0.0
    %285 = vmatpush1.msra.mxu0 0.0
    %286 = vmatprep.subr.mxu0 0.0
    %287 = vmatpush1.msra.mxu0 0.0
    %288 = vmatprep.subr.mxu0 0.0
    %289 = vmatpush1.msra.mxu0 0.0
    %290 = vmatprep.subr.mxu0 0.0
    %291 = vmatpush1.msra.mxu0 0.0
    %292 = vmatprep.subr.mxu0 0.0
    %293 = vmatpush1.msra.mxu0 0.0
    %294 = vmatprep.subr.mxu0 0.0
    %295 = vmatpush1.msra.mxu0 0.0
    %296 = vmatprep.subr.mxu0 0.0
    %297 = vmatpush1.msra.mxu0 0.0
    %298 = vmatprep.subr.mxu0 0.0
    %299 = vmatpush1.msra.mxu0 %v28
    %300 = vmatprep.subr.mxu0 0.0
    %301 = vmatpush1.msra.mxu0 %v27
    %302 = vmatprep.subr.mxu0 0.0
    %303 = vmatpush1.msra.mxu0 %v26
    %304 = vmatprep.subr.mxu0 0.0
    %305 = vmatpush1.msra.mxu0 %v25
    %306 = vmatprep.subr.mxu0 0.0
    %307 = vmatpush1.msra.mxu0 %v24
    %308 = vmatprep.subr.mxu0 0.0
    %309 = vmatpush1.msra.mxu0 %v23
    %310 = vmatprep.subr.mxu0 0.0
    %311 = vmatpush1.msra.mxu0 %v22
    %312 = vmatprep.subr.mxu0 0.0
    %313 = vmatpush1.msra.mxu0 %v21
    %314 = vmatprep.subr.mxu0 0.0
    %315 = vmatpush2.msra.mxu0 0.0
    %316 = vmatprep.subr.mxu0 0.0
    %317 = vmatpush2.msra.mxu0 0.0
    %318 = vmatprep.subr.mxu0 0.0
    %319 = vmatpush2.msra.mxu0 0.0
    %320 = vmatprep.subr.mxu0 0.0
    %321 = vmatpush2.msra.mxu0 0.0
    %322 = vmatprep.subr.mxu0 0.0
    %323 = vmatpush2.msra.mxu0 0.0
    %324 = vmatprep.subr.mxu0 0.0
    %325 = vmatpush2.msra.mxu0 0.0
    %326 = vmatprep.subr.mxu0 0.0
    %327 = vmatpush2.msra.mxu0 0.0
    %328 = vmatprep.subr.mxu0 0.0
    %329 = vmatpush2.msra.mxu0 0.0
    %330 = vmatprep.subr.mxu0 0.0
    %331 = vmatpush2.msra.mxu0 0.0
    %332 = vmatprep.subr.mxu0 0.0
    %333 = vmatpush2.msra.mxu0 0.0
    %334 = vmatprep.subr.mxu0 0.0
    %335 = vmatpush2.msra.mxu0 0.0
    %336 = vmatprep.subr.mxu0 0.0
    %337 = vmatpush2.msra.mxu0 0.0
    %338 = vmatprep.subr.mxu0 0.0
    %339 = vmatpush2.msra.mxu0 0.0
    %340 = vmatprep.subr.mxu0 0.0
    %341 = vmatpush2.msra.mxu0 0.0
    %342 = vmatprep.subr.mxu0 0.0
    %343 = vmatpush2.msra.mxu0 0.0
    %344 = vmatprep.subr.mxu0 0.0
    %345 = vmatpush2.msra.mxu0 0.0
    %346 = vmatprep.mubr.f32.mxu0 0.0
    %347 = vmatmul.mubr.f32.gmra.mxu0 %v280
    %v348 = vpop.f32.mrf.mxu0
    %v349 = vadd.f32 0.0, %v348
    %v350 = vpop.f32.mrf.mxu0
    %351 = vdwg.mxu0
    %v353 = vsel %vm256, %v278, 0
    %355 = vmatprep.subr.mxu0 0.0
    %356 = vmatpush1.msra.mxu0 0.0
    %357 = vmatprep.subr.mxu0 0.0
    %358 = vmatpush1.msra.mxu0 0.0
    %359 = vmatprep.subr.mxu0 0.0
    %360 = vmatpush1.msra.mxu0 0.0
    %361 = vmatprep.subr.mxu0 0.0
    %362 = vmatpush1.msra.mxu0 0.0
    %363 = vmatprep.subr.mxu0 0.0
    %364 = vmatpush1.msra.mxu0 0.0
    %365 = vmatprep.subr.mxu0 0.0
    %366 = vmatpush1.msra.mxu0 0.0
    %367 = vmatprep.subr.mxu0 0.0
    %368 = vmatpush1.msra.mxu0 0.0
    %369 = vmatprep.subr.mxu0 0.0
    %370 = vmatpush1.msra.mxu0 0.0
    %371 = vmatprep.subr.mxu0 0.0
    %372 = vmatpush1.msra.mxu0 %v36
    %373 = vmatprep.subr.mxu0 0.0
    %374 = vmatpush1.msra.mxu0 %v35
    %375 = vmatprep.subr.mxu0 0.0
    %376 = vmatpush1.msra.mxu0 %v34
    %377 = vmatprep.subr.mxu0 0.0
    %378 = vmatpush1.msra.mxu0 %v33
    %379 = vmatprep.subr.mxu0 0.0
    %380 = vmatpush1.msra.mxu0 %v32
    %381 = vmatprep.subr.mxu0 0.0
    %382 = vmatpush1.msra.mxu0 %v31
    %383 = vmatprep.subr.mxu0 0.0
    %384 = vmatpush1.msra.mxu0 %v30
    %385 = vmatprep.subr.mxu0 0.0
    %386 = vmatpush1.msra.mxu0 %v29
    %387 = vmatprep.subr.mxu0 0.0
    %388 = vmatpush2.msra.mxu0 0.0
    %389 = vmatprep.subr.mxu0 0.0
    %390 = vmatpush2.msra.mxu0 0.0
    %391 = vmatprep.subr.mxu0 0.0
    %392 = vmatpush2.msra.mxu0 0.0
    %393 = vmatprep.subr.mxu0 0.0
    %394 = vmatpush2.msra.mxu0 0.0
    %395 = vmatprep.subr.mxu0 0.0
    %396 = vmatpush2.msra.mxu0 0.0
    %397 = vmatprep.subr.mxu0 0.0
    %398 = vmatpush2.msra.mxu0 0.0
    %399 = vmatprep.subr.mxu0 0.0
    %400 = vmatpush2.msra.mxu0 0.0
    %401 = vmatprep.subr.mxu0 0.0
    %402 = vmatpush2.msra.mxu0 0.0
    %403 = vmatprep.subr.mxu0 0.0
    %404 = vmatpush2.msra.mxu0 0.0
    %405 = vmatprep.subr.mxu0 0.0
    %406 = vmatpush2.msra.mxu0 0.0
    %407 = vmatprep.subr.mxu0 0.0
    %408 = vmatpush2.msra.mxu0 0.0
    %409 = vmatprep.subr.mxu0 0.0
    %410 = vmatpush2.msra.mxu0 0.0
    %411 = vmatprep.subr.mxu0 0.0
    %412 = vmatpush2.msra.mxu0 0.0
    %413 = vmatprep.subr.mxu0 0.0
    %414 = vmatpush2.msra.mxu0 0.0
    %415 = vmatprep.subr.mxu0 0.0
    %416 = vmatpush2.msra.mxu0 0.0
    %417 = vmatprep.subr.mxu0 0.0
    %418 = vmatpush2.msra.mxu0 0.0
    %419 = vmatprep.mubr.f32.mxu0 0.0
    %420 = vmatmul.mubr.f32.gmra.mxu0 %v353
    %v421 = vpop.f32.mrf.mxu0
    %v422 = vadd.f32 0.0, %v421
    %v423 = vpop.f32.mrf.mxu0
    %424 = vdwg.mxu0
    %v425 = vadd.f32 %v349, %v45
    %v426 = vadd.f32 %v422, %v45
    %v428 = vsel %vm62, %v425, 0
    %430 = vmatprep.subr.mxu0 0.0
    %431 = vmatpush1.xpose.msra.mxu0 0.0
    %432 = vmatprep.subr.mxu0 0.0
    %433 = vmatpush1.xpose.msra.mxu0 0.0
    %434 = vmatprep.subr.mxu0 0.0
    %435 = vmatpush1.xpose.msra.mxu0 0.0
    %436 = vmatprep.subr.mxu0 0.0
    %437 = vmatpush1.xpose.msra.mxu0 0.0
    %438 = vmatprep.subr.mxu0 0.0
    %439 = vmatpush1.xpose.msra.mxu0 0.0
    %440 = vmatprep.subr.mxu0 0.0
    %441 = vmatpush1.xpose.msra.mxu0 0.0
    %442 = vmatprep.subr.mxu0 0.0
    %443 = vmatpush1.xpose.msra.mxu0 0.0
    %444 = vmatprep.subr.mxu0 0.0
    %445 = vmatpush1.xpose.msra.mxu0 0.0
    %446 = vmatprep.subr.mxu0 0.0
    %447 = vmatpush1.xpose.msra.mxu0 %v88
    %448 = vmatprep.subr.mxu0 0.0
    %449 = vmatpush1.xpose.msra.mxu0 %v85
    %450 = vmatprep.subr.mxu0 0.0
    %451 = vmatpush1.xpose.msra.mxu0 %v82
    %452 = vmatprep.subr.mxu0 0.0
    %453 = vmatpush1.xpose.msra.mxu0 %v79
    %454 = vmatprep.subr.mxu0 0.0
    %455 = vmatpush1.xpose.msra.mxu0 %v76
    %456 = vmatprep.subr.mxu0 0.0
    %457 = vmatpush1.xpose.msra.mxu0 %v73
    %458 = vmatprep.subr.mxu0 0.0
    %459 = vmatpush1.xpose.msra.mxu0 %v70
    %460 = vmatprep.subr.mxu0 0.0
    %461 = vmatpush1.xpose.msra.mxu0 %v67
    %462 = vmatprep.subr.mxu0 0.0
    %463 = vmatpush2.xpose.msra.mxu0 0.0
    %464 = vmatprep.subr.mxu0 0.0
    %465 = vmatpush2.xpose.msra.mxu0 0.0
    %466 = vmatprep.subr.mxu0 0.0
    %467 = vmatpush2.xpose.msra.mxu0 0.0
    %468 = vmatprep.subr.mxu0 0.0
    %469 = vmatpush2.xpose.msra.mxu0 0.0
    %470 = vmatprep.subr.mxu0 0.0
    %471 = vmatpush2.xpose.msra.mxu0 0.0
    %472 = vmatprep.subr.mxu0 0.0
    %473 = vmatpush2.xpose.msra.mxu0 0.0
    %474 = vmatprep.subr.mxu0 0.0
    %475 = vmatpush2.xpose.msra.mxu0 0.0
    %476 = vmatprep.subr.mxu0 0.0
    %477 = vmatpush2.xpose.msra.mxu0 0.0
    %478 = vmatprep.subr.mxu0 0.0
    %479 = vmatpush2.xpose.msra.mxu0 0.0
    %480 = vmatprep.subr.mxu0 0.0
    %481 = vmatpush2.xpose.msra.mxu0 0.0
    %482 = vmatprep.subr.mxu0 0.0
    %483 = vmatpush2.xpose.msra.mxu0 0.0
    %484 = vmatprep.subr.mxu0 0.0
    %485 = vmatpush2.xpose.msra.mxu0 0.0
    %486 = vmatprep.subr.mxu0 0.0
    %487 = vmatpush2.xpose.msra.mxu0 0.0
    %488 = vmatprep.subr.mxu0 0.0
    %489 = vmatpush2.xpose.msra.mxu0 0.0
    %490 = vmatprep.subr.mxu0 0.0
    %491 = vmatpush2.xpose.msra.mxu0 0.0
    %492 = vmatprep.subr.mxu0 0.0
    %493 = vmatpush2.xpose.msra.mxu0 0.0
    %494 = vmatprep.mubr.f32.mxu0 0.0
    %495 = vmatmul.mubr.f32.gmra.mxu0 %v428
    %v496 = vpop.f32.mrf.mxu0
    %v497 = vadd.f32 0.0, %v496
    %v498 = vpop.f32.mrf.mxu0
    %499 = vdwg.mxu0
    %v501 = vsel %vm62, %v426, 0
    %503 = vmatprep.subr.mxu0 0.0
    %504 = vmatpush1.xpose.msra.mxu0 0.0
    %505 = vmatprep.subr.mxu0 0.0
    %506 = vmatpush1.xpose.msra.mxu0 0.0
    %507 = vmatprep.subr.mxu0 0.0
    %508 = vmatpush1.xpose.msra.mxu0 0.0
    %509 = vmatprep.subr.mxu0 0.0
    %510 = vmatpush1.xpose.msra.mxu0 0.0
    %511 = vmatprep.subr.mxu0 0.0
    %512 = vmatpush1.xpose.msra.mxu0 0.0
    %513 = vmatprep.subr.mxu0 0.0
    %514 = vmatpush1.xpose.msra.mxu0 0.0
    %515 = vmatprep.subr.mxu0 0.0
    %516 = vmatpush1.xpose.msra.mxu0 0.0
    %517 = vmatprep.subr.mxu0 0.0
    %518 = vmatpush1.xpose.msra.mxu0 0.0
    %519 = vmatprep.subr.mxu0 0.0
    %520 = vmatpush1.xpose.msra.mxu0 %v182
    %521 = vmatprep.subr.mxu0 0.0
    %522 = vmatpush1.xpose.msra.mxu0 %v179
    %523 = vmatprep.subr.mxu0 0.0
    %524 = vmatpush1.xpose.msra.mxu0 %v176
    %525 = vmatprep.subr.mxu0 0.0
    %526 = vmatpush1.xpose.msra.mxu0 %v173
    %527 = vmatprep.subr.mxu0 0.0
    %528 = vmatpush1.xpose.msra.mxu0 %v170
    %529 = vmatprep.subr.mxu0 0.0
    %530 = vmatpush1.xpose.msra.mxu0 %v167
    %531 = vmatprep.subr.mxu0 0.0
    %532 = vmatpush1.xpose.msra.mxu0 %v164
    %533 = vmatprep.subr.mxu0 0.0
    %534 = vmatpush1.xpose.msra.mxu0 %v161
    %535 = vmatprep.subr.mxu0 0.0
    %536 = vmatpush2.xpose.msra.mxu0 0.0
    %537 = vmatprep.subr.mxu0 0.0
    %538 = vmatpush2.xpose.msra.mxu0 0.0
    %539 = vmatprep.subr.mxu0 0.0
    %540 = vmatpush2.xpose.msra.mxu0 0.0
    %541 = vmatprep.subr.mxu0 0.0
    %542 = vmatpush2.xpose.msra.mxu0 0.0
    %543 = vmatprep.subr.mxu0 0.0
    %544 = vmatpush2.xpose.msra.mxu0 0.0
    %545 = vmatprep.subr.mxu0 0.0
    %546 = vmatpush2.xpose.msra.mxu0 0.0
    %547 = vmatprep.subr.mxu0 0.0
    %548 = vmatpush2.xpose.msra.mxu0 0.0
    %549 = vmatprep.subr.mxu0 0.0
    %550 = vmatpush2.xpose.msra.mxu0 0.0
    %551 = vmatprep.subr.mxu0 0.0
    %552 = vmatpush2.xpose.msra.mxu0 0.0
    %553 = vmatprep.subr.mxu0 0.0
    %554 = vmatpush2.xpose.msra.mxu0 0.0
    %555 = vmatprep.subr.mxu0 0.0
    %556 = vmatpush2.xpose.msra.mxu0 0.0
    %557 = vmatprep.subr.mxu0 0.0
    %558 = vmatpush2.xpose.msra.mxu0 0.0
    %559 = vmatprep.subr.mxu0 0.0
    %560 = vmatpush2.xpose.msra.mxu0 0.0
    %561 = vmatprep.subr.mxu0 0.0
    %562 = vmatpush2.xpose.msra.mxu0 0.0
    %563 = vmatprep.subr.mxu0 0.0
    %564 = vmatpush2.xpose.msra.mxu0 0.0
    %565 = vmatprep.subr.mxu0 0.0
    %566 = vmatpush2.xpose.msra.mxu0 0.0
    %567 = vmatprep.mubr.f32.mxu0 0.0
    %568 = vmatmul.mubr.f32.gmra.mxu0 %v501
    %v569 = vpop.f32.mrf.mxu0
    %v570 = vadd.f32 0.0, %v569
    %v571 = vpop.f32.mrf.mxu0
    %572 = vdwg.mxu0
    %v573 = vmul.f32 %v497, 0.17677669
    %v574 = vmul.f32 %v570, 0.17677669
    %v575 = vsel %vm256, %v573, -inf
    %576 = vmax.xlane.f32.xlu0 %v575
    %v577 = vpop.xlane.xlu0 %576
    %v578 = vsel %vm256, %v574, -inf
    %579 = vmax.xlane.f32.xlu0 %v578
    %v580 = vpop.xlane.xlu0 %579
    %v581 = vsub.f32 %v573, %v577
    %v582 = vsub.f32 %v574, %v580
    %v583 = vmul.f32 %v581, 1.442695
    %v584 = vpow.pop %v583
    %v585 = vmul.f32 %v582, 1.442695
    %v586 = vpow.pop %v585
    %v587 = vsel %vm256, %v584, 0.0
    %588 = vadd.xlane.f32.xlu0 %v587
    %v589 = vpop.xlane.xlu0 %588
    %v590 = vsel %vm256, %v586, 0.0
    %591 = vadd.xlane.f32.xlu0 %v590
    %v592 = vpop.xlane.xlu0 %591
    %v593 = vrcp.pop %v589
    %v594 = vrcp.pop %v592
    %v595 = vmul.f32 %v584, %v593
    %v596 = vmul.f32 %v586, %v594
    %v598 = vsel %vm256, %v595, 0
    %600 = vmatprep.subr.mxu0 0.0
    %601 = vmatpush1.msra.mxu0 0.0
    %602 = vmatprep.subr.mxu0 0.0
    %603 = vmatpush1.msra.mxu0 0.0
    %604 = vmatprep.subr.mxu0 0.0
    %605 = vmatpush1.msra.mxu0 0.0
    %606 = vmatprep.subr.mxu0 0.0
    %607 = vmatpush1.msra.mxu0 0.0
    %608 = vmatprep.subr.mxu0 0.0
    %609 = vmatpush1.msra.mxu0 0.0
    %610 = vmatprep.subr.mxu0 0.0
    %611 = vmatpush1.msra.mxu0 0.0
    %612 = vmatprep.subr.mxu0 0.0
    %613 = vmatpush1.msra.mxu0 0.0
    %614 = vmatprep.subr.mxu0 0.0
    %615 = vmatpush1.msra.mxu0 0.0
    %616 = vmatprep.subr.mxu0 0.0
    %617 = vmatpush1.msra.mxu0 %v28
    %618 = vmatprep.subr.mxu0 0.0
    %619 = vmatpush1.msra.mxu0 %v27
    %620 = vmatprep.subr.mxu0 0.0
    %621 = vmatpush1.msra.mxu0 %v26
    %622 = vmatprep.subr.mxu0 0.0
    %623 = vmatpush1.msra.mxu0 %v25
    %624 = vmatprep.subr.mxu0 0.0
    %625 = vmatpush1.msra.mxu0 %v24
    %626 = vmatprep.subr.mxu0 0.0
    %627 = vmatpush1.msra.mxu0 %v23
    %628 = vmatprep.subr.mxu0 0.0
    %629 = vmatpush1.msra.mxu0 %v22
    %630 = vmatprep.subr.mxu0 0.0
    %631 = vmatpush1.msra.mxu0 %v21
    %632 = vmatprep.subr.mxu0 0.0
    %633 = vmatpush2.msra.mxu0 0.0
    %634 = vmatprep.subr.mxu0 0.0
    %635 = vmatpush2.msra.mxu0 0.0
    %636 = vmatprep.subr.mxu0 0.0
    %637 = vmatpush2.msra.mxu0 0.0
    %638 = vmatprep.subr.mxu0 0.0
    %639 = vmatpush2.msra.mxu0 0.0
    %640 = vmatprep.subr.mxu0 0.0
    %641 = vmatpush2.msra.mxu0 0.0
    %642 = vmatprep.subr.mxu0 0.0
    %643 = vmatpush2.msra.mxu0 0.0
    %644 = vmatprep.subr.mxu0 0.0
    %645 = vmatpush2.msra.mxu0 0.0
    %646 = vmatprep.subr.mxu0 0.0
    %647 = vmatpush2.msra.mxu0 0.0
    %648 = vmatprep.subr.mxu0 0.0
    %649 = vmatpush2.msra.mxu0 0.0
    %650 = vmatprep.subr.mxu0 0.0
    %651 = vmatpush2.msra.mxu0 0.0
    %652 = vmatprep.subr.mxu0 0.0
    %653 = vmatpush2.msra.mxu0 0.0
    %654 = vmatprep.subr.mxu0 0.0
    %655 = vmatpush2.msra.mxu0 0.0
    %656 = vmatprep.subr.mxu0 0.0
    %657 = vmatpush2.msra.mxu0 0.0
    %658 = vmatprep.subr.mxu0 0.0
    %659 = vmatpush2.msra.mxu0 0.0
    %660 = vmatprep.subr.mxu0 0.0
    %661 = vmatpush2.msra.mxu0 0.0
    %662 = vmatprep.subr.mxu0 0.0
    %663 = vmatpush2.msra.mxu0 0.0
    %664 = vmatprep.mubr.f32.mxu0 0.0
    %665 = vmatmul.mubr.f32.gmra.mxu0 %v598
    %v666 = vpop.f32.mrf.mxu0
    %v667 = vadd.f32 0.0, %v666
    %v668 = vpop.f32.mrf.mxu0
    %669 = vdwg.mxu0
    %v671 = vsel %vm256, %v596, 0
    %673 = vmatprep.subr.mxu0 0.0
    %674 = vmatpush1.msra.mxu0 0.0
    %675 = vmatprep.subr.mxu0 0.0
    %676 = vmatpush1.msra.mxu0 0.0
    %677 = vmatprep.subr.mxu0 0.0
    %678 = vmatpush1.msra.mxu0 0.0
    %679 = vmatprep.subr.mxu0 0.0
    %680 = vmatpush1.msra.mxu0 0.0
    %681 = vmatprep.subr.mxu0 0.0
    %682 = vmatpush1.msra.mxu0 0.0
    %683 = vmatprep.subr.mxu0 0.0
    %684 = vmatpush1.msra.mxu0 0.0
    %685 = vmatprep.subr.mxu0 0.0
    %686 = vmatpush1.msra.mxu0 0.0
    %687 = vmatprep.subr.mxu0 0.0
    %688 = vmatpush1.msra.mxu0 0.0
    %689 = vmatprep.subr.mxu0 0.0
    %690 = vmatpush1.msra.mxu0 %v36
    %691 = vmatprep.subr.mxu0 0.0
    %692 = vmatpush1.msra.mxu0 %v35
    %693 = vmatprep.subr.mxu0 0.0
    %694 = vmatpush1.msra.mxu0 %v34
    %695 = vmatprep.subr.mxu0 0.0
    %696 = vmatpush1.msra.mxu0 %v33
    %697 = vmatprep.subr.mxu0 0.0
    %698 = vmatpush1.msra.mxu0 %v32
    %699 = vmatprep.subr.mxu0 0.0
    %700 = vmatpush1.msra.mxu0 %v31
    %701 = vmatprep.subr.mxu0 0.0
    %702 = vmatpush1.msra.mxu0 %v30
    %703 = vmatprep.subr.mxu0 0.0
    %704 = vmatpush1.msra.mxu0 %v29
    %705 = vmatprep.subr.mxu0 0.0
    %706 = vmatpush2.msra.mxu0 0.0
    %707 = vmatprep.subr.mxu0 0.0
    %708 = vmatpush2.msra.mxu0 0.0
    %709 = vmatprep.subr.mxu0 0.0
    %710 = vmatpush2.msra.mxu0 0.0
    %711 = vmatprep.subr.mxu0 0.0
    %712 = vmatpush2.msra.mxu0 0.0
    %713 = vmatprep.subr.mxu0 0.0
    %714 = vmatpush2.msra.mxu0 0.0
    %715 = vmatprep.subr.mxu0 0.0
    %716 = vmatpush2.msra.mxu0 0.0
    %717 = vmatprep.subr.mxu0 0.0
    %718 = vmatpush2.msra.mxu0 0.0
    %719 = vmatprep.subr.mxu0 0.0
    %720 = vmatpush2.msra.mxu0 0.0
    %721 = vmatprep.subr.mxu0 0.0
    %722 = vmatpush2.msra.mxu0 0.0
    %723 = vmatprep.subr.mxu0 0.0
    %724 = vmatpush2.msra.mxu0 0.0
    %725 = vmatprep.subr.mxu0 0.0
    %726 = vmatpush2.msra.mxu0 0.0
    %727 = vmatprep.subr.mxu0 0.0
    %728 = vmatpush2.msra.mxu0 0.0
    %729 = vmatprep.subr.mxu0 0.0
    %730 = vmatpush2.msra.mxu0 0.0
    %731 = vmatprep.subr.mxu0 0.0
    %732 = vmatpush2.msra.mxu0 0.0
    %733 = vmatprep.subr.mxu0 0.0
    %734 = vmatpush2.msra.mxu0 0.0
    %735 = vmatprep.subr.mxu0 0.0
    %736 = vmatpush2.msra.mxu0 0.0
    %737 = vmatprep.mubr.f32.mxu0 0.0
    %738 = vmatmul.mubr.f32.gmra.mxu0 %v671
    %v739 = vpop.f32.mrf.mxu0
    %v740 = vadd.f32 0.0, %v739
    %v741 = vpop.f32.mrf.mxu0
    %742 = vdwg.mxu0
    %v743 = vadd.f32 %v349, %v667
    %v744 = vadd.f32 %v422, %v740
    %v745 = vld [vmem:[%s3] sm:$0xff]
    %v746 = vld [vmem:[%s3 + $0x8] sm:$0xff]
    %v747 = vld [vmem:[%s3 + $0x10] sm:$0xff]
    %v748 = vld [vmem:[%s3 + $0x18] sm:$0xff]
    %v749 = vld [vmem:[%s4] sm:$0x1]
    %v751 = vlaneseq
    %v752 = vshrl.u32 %v751, 7
    %v753 = vsub.s32 0, %v752
    %v754 = vrot.slane %v749, %v753
    %v757 = vsel %vm62, %v743, 0
    %v760 = vsel %vm62, %v744, 0
    %762 = vmatprep.subr.mxu0 0.0
    %763 = vmatpush1.msra.mxu0 0.0
    %764 = vmatprep.subr.mxu0 0.0
    %765 = vmatpush1.msra.mxu0 0.0
    %766 = vmatprep.subr.mxu0 0.0
    %767 = vmatpush1.msra.mxu0 0.0
    %768 = vmatprep.subr.mxu0 0.0
    %769 = vmatpush1.msra.mxu0 0.0
    %770 = vmatprep.subr.mxu0 0.0
    %771 = vmatpush1.msra.mxu0 0.0
    %772 = vmatprep.subr.mxu0 0.0
    %773 = vmatpush1.msra.mxu0 0.0
    %774 = vmatprep.subr.mxu0 0.0
    %775 = vmatpush1.msra.mxu0 0.0
    %776 = vmatprep.subr.mxu0 0.0
    %777 = vmatpush1.msra.mxu0 0.0
    %778 = vmatprep.subr.mxu0 0.0
    %779 = vmatpush1.msra.mxu0 0.0
    %780 = vmatprep.subr.mxu0 0.0
    %781 = vmatpush1.msra.mxu0 0.0
    %782 = vmatprep.subr.mxu0 0.0
    %783 = vmatpush1.msra.mxu0 0.0
    %784 = vmatprep.subr.mxu0 0.0
    %785 = vmatpush1.msra.mxu0 0.0
    %786 = vmatprep.subr.mxu0 0.0
    %787 = vmatpush1.msra.mxu0 %v748
    %788 = vmatprep.subr.mxu0 0.0
    %789 = vmatpush1.msra.mxu0 %v747
    %790 = vmatprep.subr.mxu0 0.0
    %791 = vmatpush1.msra.mxu0 %v746
    %792 = vmatprep.subr.mxu0 0.0
    %793 = vmatpush1.msra.mxu0 %v745
    %794 = vmatprep.subr.mxu0 0.0
    %795 = vmatpush2.msra.mxu0 0.0
    %796 = vmatprep.subr.mxu0 0.0
    %797 = vmatpush2.msra.mxu0 0.0
    %798 = vmatprep.subr.mxu0 0.0
    %799 = vmatpush2.msra.mxu0 0.0
    %800 = vmatprep.subr.mxu0 0.0
    %801 = vmatpush2.msra.mxu0 0.0
    %802 = vmatprep.subr.mxu0 0.0
    %803 = vmatpush2.msra.mxu0 0.0
    %804 = vmatprep.subr.mxu0 0.0
    %805 = vmatpush2.msra.mxu0 0.0
    %806 = vmatprep.subr.mxu0 0.0
    %807 = vmatpush2.msra.mxu0 0.0
    %808 = vmatprep.subr.mxu0 0.0
    %809 = vmatpush2.msra.mxu0 0.0
    %810 = vmatprep.subr.mxu0 0.0
    %811 = vmatpush2.msra.mxu0 0.0
    %812 = vmatprep.subr.mxu0 0.0
    %813 = vmatpush2.msra.mxu0 0.0
    %814 = vmatprep.subr.mxu0 0.0
    %815 = vmatpush2.msra.mxu0 0.0
    %816 = vmatprep.subr.mxu0 0.0
    %817 = vmatpush2.msra.mxu0 0.0
    %818 = vmatprep.subr.mxu0 0.0
    %819 = vmatpush2.msra.mxu0 0.0
    %820 = vmatprep.subr.mxu0 0.0
    %821 = vmatpush2.msra.mxu0 0.0
    %822 = vmatprep.subr.mxu0 0.0
    %823 = vmatpush2.msra.mxu0 0.0
    %824 = vmatprep.subr.mxu0 0.0
    %825 = vmatpush2.msra.mxu0 0.0
    %826 = vmatprep.mubr.f32.mxu0 0.0
    %827 = vmatmul.mubr.f32.gmra.mxu0 %v757
    %v828 = vpop.f32.mrf.mxu0
    %v829 = vadd.f32 %v754, %v828
    %v830 = vpop.f32.mrf.mxu0
    %831 = vmatprep.mubr.f32.mxu0 0.0
    %832 = vmatmul.mubr.f32.gmra.mxu0 %v760
    %v833 = vpop.f32.mrf.mxu0
    %v834 = vadd.f32 %v754, %v833
    %v835 = vpop.f32.mrf.mxu0
    %836 = vdwg.mxu0
    %v837 = vmax.f32 %v829, 0.0
    %v838 = vmax.f32 %v834, 0.0
    %841 = vrot.lane.b32.xlu0 %v837, 123
    %v842 = vpop.permute.xlu0 %841
    %843 = vrot.lane.b32.xlu0 %v838, 123
    %v844 = vpop.permute.xlu0 %843
    %849 = vrot.lane.b32.xlu0 %v745, 91
    %v850 = vpop.permute.xlu0 %849
    %851 = vrot.lane.b32.xlu0 %v746, 91
    %v852 = vpop.permute.xlu0 %851
    %853 = vrot.lane.b32.xlu0 %v747, 91
    %v854 = vpop.permute.xlu0 %853
    %855 = vrot.lane.b32.xlu0 %v748, 91
    %v856 = vpop.permute.xlu0 %855
    %861 = vrot.lane.b32.xlu0 %v754, 91
    %v862 = vpop.permute.xlu0 %861
    %v864 = vsel %vm62, %v842, 0
    %v866 = vsel %vm62, %v844, 0
    %868 = vmatprep.subr.mxu0 0.0
    %869 = vmatpush1.msra.mxu0 0.0
    %870 = vmatprep.subr.mxu0 0.0
    %871 = vmatpush1.msra.mxu0 0.0
    %872 = vmatprep.subr.mxu0 0.0
    %873 = vmatpush1.msra.mxu0 0.0
    %874 = vmatprep.subr.mxu0 0.0
    %875 = vmatpush1.msra.mxu0 0.0
    %876 = vmatprep.subr.mxu0 0.0
    %877 = vmatpush1.msra.mxu0 0.0
    %878 = vmatprep.subr.mxu0 0.0
    %879 = vmatpush1.msra.mxu0 0.0
    %880 = vmatprep.subr.mxu0 0.0
    %881 = vmatpush1.msra.mxu0 0.0
    %882 = vmatprep.subr.mxu0 0.0
    %883 = vmatpush1.msra.mxu0 0.0
    %884 = vmatprep.subr.mxu0 0.0
    %885 = vmatpush1.msra.mxu0 0.0
    %886 = vmatprep.subr.mxu0 0.0
    %887 = vmatpush1.msra.mxu0 0.0
    %888 = vmatprep.subr.mxu0 0.0
    %889 = vmatpush1.msra.mxu0 0.0
    %890 = vmatprep.subr.mxu0 0.0
    %891 = vmatpush1.msra.mxu0 0.0
    %892 = vmatprep.subr.mxu0 0.0
    %893 = vmatpush1.msra.mxu0 %v856
    %894 = vmatprep.subr.mxu0 0.0
    %895 = vmatpush1.msra.mxu0 %v854
    %896 = vmatprep.subr.mxu0 0.0
    %897 = vmatpush1.msra.mxu0 %v852
    %898 = vmatprep.subr.mxu0 0.0
    %899 = vmatpush1.msra.mxu0 %v850
    %900 = vmatprep.subr.mxu0 0.0
    %901 = vmatpush2.msra.mxu0 0.0
    %902 = vmatprep.subr.mxu0 0.0
    %903 = vmatpush2.msra.mxu0 0.0
    %904 = vmatprep.subr.mxu0 0.0
    %905 = vmatpush2.msra.mxu0 0.0
    %906 = vmatprep.subr.mxu0 0.0
    %907 = vmatpush2.msra.mxu0 0.0
    %908 = vmatprep.subr.mxu0 0.0
    %909 = vmatpush2.msra.mxu0 0.0
    %910 = vmatprep.subr.mxu0 0.0
    %911 = vmatpush2.msra.mxu0 0.0
    %912 = vmatprep.subr.mxu0 0.0
    %913 = vmatpush2.msra.mxu0 0.0
    %914 = vmatprep.subr.mxu0 0.0
    %915 = vmatpush2.msra.mxu0 0.0
    %916 = vmatprep.subr.mxu0 0.0
    %917 = vmatpush2.msra.mxu0 0.0
    %918 = vmatprep.subr.mxu0 0.0
    %919 = vmatpush2.msra.mxu0 0.0
    %920 = vmatprep.subr.mxu0 0.0
    %921 = vmatpush2.msra.mxu0 0.0
    %922 = vmatprep.subr.mxu0 0.0
    %923 = vmatpush2.msra.mxu0 0.0
    %924 = vmatprep.subr.mxu0 0.0
    %925 = vmatpush2.msra.mxu0 0.0
    %926 = vmatprep.subr.mxu0 0.0
    %927 = vmatpush2.msra.mxu0 0.0
    %928 = vmatprep.subr.mxu0 0.0
    %929 = vmatpush2.msra.mxu0 0.0
    %930 = vmatprep.subr.mxu0 0.0
    %931 = vmatpush2.msra.mxu0 0.0
    %932 = vmatprep.mubr.f32.mxu0 0.0
    %933 = vmatmul.mubr.f32.gmra.mxu0 %v864
    %v934 = vpop.f32.mrf.mxu0
    %v935 = vadd.f32 %v862, %v934
    %v936 = vpop.f32.mrf.mxu0
    %937 = vmatprep.mubr.f32.mxu0 0.0
    %938 = vmatmul.mubr.f32.gmra.mxu0 %v866
    %v939 = vpop.f32.mrf.mxu0
    %v940 = vadd.f32 %v862, %v939
    %v941 = vpop.f32.mrf.mxu0
    %942 = vdwg.mxu0
    %v943 = vmax.f32 %v935, 0.0
    %v944 = vmax.f32 %v940, 0.0
    %945 = vrot.lane.b32.xlu0 %v745, 59
    %v946 = vpop.permute.xlu0 %945
    %947 = vrot.lane.b32.xlu0 %v746, 59
    %v948 = vpop.permute.xlu0 %947
    %949 = vrot.lane.b32.xlu0 %v747, 59
    %v950 = vpop.permute.xlu0 %949
    %951 = vrot.lane.b32.xlu0 %v748, 59
    %v952 = vpop.permute.xlu0 %951
    %957 = vrot.lane.b32.xlu0 %v754, 59
    %v958 = vpop.permute.xlu0 %957
    %v961 = vsel %vm62, %v943, 0
    %v964 = vsel %vm62, %v944, 0
    %966 = vmatprep.subr.mxu0 0.0
    %967 = vmatpush1.msra.mxu0 0.0
    %968 = vmatprep.subr.mxu0 0.0
    %969 = vmatpush1.msra.mxu0 0.0
    %970 = vmatprep.subr.mxu0 0.0
    %971 = vmatpush1.msra.mxu0 0.0
    %972 = vmatprep.subr.mxu0 0.0
    %973 = vmatpush1.msra.mxu0 0.0
    %974 = vmatprep.subr.mxu0 0.0
    %975 = vmatpush1.msra.mxu0 0.0
    %976 = vmatprep.subr.mxu0 0.0
    %977 = vmatpush1.msra.mxu0 0.0
    %978 = vmatprep.subr.mxu0 0.0
    %979 = vmatpush1.msra.mxu0 0.0
    %980 = vmatprep.subr.mxu0 0.0
    %981 = vmatpush1.msra.mxu0 0.0
    %982 = vmatprep.subr.mxu0 0.0
    %983 = vmatpush1.msra.mxu0 0.0
    %984 = vmatprep.subr.mxu0 0.0
    %985 = vmatpush1.msra.mxu0 0.0
    %986 = vmatprep.subr.mxu0 0.0
    %987 = vmatpush1.msra.mxu0 0.0
    %988 = vmatprep.subr.mxu0 0.0
    %989 = vmatpush1.msra.mxu0 0.0
    %990 = vmatprep.subr.mxu0 0.0
    %991 = vmatpush1.msra.mxu0 %v952
    %992 = vmatprep.subr.mxu0 0.0
    %993 = vmatpush1.msra.mxu0 %v950
    %994 = vmatprep.subr.mxu0 0.0
    %995 = vmatpush1.msra.mxu0 %v948
    %996 = vmatprep.subr.mxu0 0.0
    %997 = vmatpush1.msra.mxu0 %v946
    %998 = vmatprep.subr.mxu0 0.0
    %999 = vmatpush2.msra.mxu0 0.0
    %1000 = vmatprep.subr.mxu0 0.0
    %1001 = vmatpush2.msra.mxu0 0.0
    %1002 = vmatprep.subr.mxu0 0.0
    %1003 = vmatpush2.msra.mxu0 0.0
    %1004 = vmatprep.subr.mxu0 0.0
    %1005 = vmatpush2.msra.mxu0 0.0
    %1006 = vmatprep.subr.mxu0 0.0
    %1007 = vmatpush2.msra.mxu0 0.0
    %1008 = vmatprep.subr.mxu0 0.0
    %1009 = vmatpush2.msra.mxu0 0.0
    %1010 = vmatprep.subr.mxu0 0.0
    %1011 = vmatpush2.msra.mxu0 0.0
    %1012 = vmatprep.subr.mxu0 0.0
    %1013 = vmatpush2.msra.mxu0 0.0
    %1014 = vmatprep.subr.mxu0 0.0
    %1015 = vmatpush2.msra.mxu0 0.0
    %1016 = vmatprep.subr.mxu0 0.0
    %1017 = vmatpush2.msra.mxu0 0.0
    %1018 = vmatprep.subr.mxu0 0.0
    %1019 = vmatpush2.msra.mxu0 0.0
    %1020 = vmatprep.subr.mxu0 0.0
    %1021 = vmatpush2.msra.mxu0 0.0
    %1022 = vmatprep.subr.mxu0 0.0
    %1023 = vmatpush2.msra.mxu0 0.0
    %1024 = vmatprep.subr.mxu0 0.0
    %1025 = vmatpush2.msra.mxu0 0.0
    %1026 = vmatprep.subr.mxu0 0.0
    %1027 = vmatpush2.msra.mxu0 0.0
    %1028 = vmatprep.subr.mxu0 0.0
    %1029 = vmatpush2.msra.mxu0 0.0
    %1030 = vmatprep.mubr.f32.mxu0 0.0
    %1031 = vmatmul.mubr.f32.gmra.mxu0 %v961
    %v1032 = vpop.f32.mrf.mxu0
    %v1033 = vadd.f32 %v958, %v1032
    %v1034 = vpop.f32.mrf.mxu0
    %1035 = vmatprep.mubr.f32.mxu0 0.0
    %1036 = vmatmul.mubr.f32.gmra.mxu0 %v964
    %v1037 = vpop.f32.mrf.mxu0
    %v1038 = vadd.f32 %v958, %v1037
    %v1039 = vpop.f32.mrf.mxu0
    %1040 = vdwg.mxu0
    %v1041 = vxor.u32 %v1033, 2147483648
    %v1042 = vxor.u32 %v1038, 2147483648
    %v1043 = vmul.f32 %v1041, 1.442695
    %v1044 = vpow.pop %v1043
    %v1045 = vmul.f32 %v1042, 1.442695
    %v1046 = vpow.pop %v1045
    %v1047 = vadd.f32 %v1044, 1.0
    %v1048 = vadd.f32 %v1046, 1.0
    %v1049 = vrcp.pop %v1047
    %v1050 = vmul.f32 1.0, %v1049
    %v1051 = vrcp.pop %v1048
    %v1052 = vmul.f32 1.0, %v1051
    %1055 = vrot.lane.b32.xlu0 %v1050, 5
    %v1056 = vpop.permute.xlu0 %1055
    %1057 = vrot.lane.b32.xlu0 %v1052, 5
    %v1058 = vpop.permute.xlu0 %1057
    %vm1061 = vcmask 39936
    %v1062 = vsel %vm1061, %v829, %v1056
    %v1063 = vsel %vm1061, %v834, %v1058
    %vm1064 = vcmask 72704
    %v1065 = vsel %vm1064, %v1062, 0.0
    %v1066 = vsel %vm1064, %v1063, 0.0
    %1067 = vst [vmem:[#allocation2] sm:$0xff] %v1065
    %1068 = vst [vmem:[#allocation2 + $0x8] sm:$0xff] %v1066
    // Predicated region
    $region22: #{tpu_custom_call.1} parent=1 // pred_check
      _
    $region23: #{tpu_custom_call.1} parent=1 // pred_check_branch
      %1070 = sbr.rel (0) target = $region25
    $region24: #{tpu_custom_call.1} parent=1 // pred_region
      %s1072 = ssub.s32 256, 256
      %1073 = vsyncadd [#allocation3], %s1072
      %s1074 = sshll.u32 [#allocation2], 4
      %s1075 = int_to_ptr.vmem [resolvable:$true] %s1074
      %1080 = dma.vmem_to_hbm [thread:$0]  %s1075, 256, %s5, [#allocation3], 128, 128, 8
    $region25: #{tpu_custom_call.1} parent=1 // pred_fallthru
      _
    // Predicated region
    $region26: #{tpu_custom_call.1} parent=1 // pred_check
      _
    $region27: #{tpu_custom_call.1} parent=1 // pred_check_branch
      %1082 = sbr.rel (0) target = $region29
    $region28: #{tpu_custom_call.1} parent=1 // pred_region
      %1083 = dma.done [#allocation3], 256
    $region29: #{tpu_custom_call.1} parent=1 // pred_fallthru
      _
    %1084 = vsyncpa [#allocation3], 1

</llo_original>
